<compile_context>
chip_gen: v5e
topology: v5e:2x2
jax: 0.10.0
libtpu: 0.0.40
codegen_flags: <defaults>
</compile_context>

<pallas_src>
import jax
import jax.numpy as jnp
from jax import lax
from jax.experimental import pallas as pl
from jax.experimental.pallas import tpu as pltpu

EPS = 1e-5
_VMEM_LIMIT = 32 * 1024 * 1024          # explicit scoped-VMEM limit (safe on v5e/v6e/v7x)
_TILE_TARGET_BYTES = 4 * 1024 * 1024    # per x tile; ~16 MiB with double-buffered in+out
_MAX_TILE_ROWS = 2048
_MIN_TILE_ROWS = 128


def _round_up(v, m):
    return (v + m - 1) // m * m


def _choose_tile_rows(n, c_padded, itemsize):
    """Rows per tile: big enough to hit the HBM roofline, small enough for VMEM."""
    tn = _TILE_TARGET_BYTES // max(1, c_padded * itemsize)
    tn = max(_MIN_TILE_ROWS, min(_MAX_TILE_ROWS, tn))
    tn = max(8, (tn // 8) * 8)
    if n <= tn:
        tn = _round_up(max(n, 8), 8)
    return tn


def _stats_kernel(x_ref, stats_ref):
    """Accumulate per-channel [sum, sum_sq] over the N (row) grid axis."""
    @pl.when(pl.program_id(0) == 0)
    def _():
        stats_ref[...] = jnp.zeros_like(stats_ref)

    x = x_ref[...].astype(jnp.float32)
    ones = jnp.ones((1, x.shape[0]), dtype=jnp.float32)
    s = jnp.dot(ones, x, preferred_element_type=jnp.float32)        # [1, Cp]
    sq = jnp.dot(ones, x * x, preferred_element_type=jnp.float32)   # [1, Cp]
    stats_ref[...] = stats_ref[...] + jnp.concatenate([s, sq], axis=0)


def _affine_kernel(x_ref, scale_ref, shift_ref, o_ref):
    """Streaming pass: y = x * scale + shift (per-channel, folded BN)."""
    x = x_ref[...].astype(jnp.float32)
    o_ref[...] = (x * scale_ref[...] + shift_ref[...]).astype(o_ref.dtype)


def _bias_kernel(x_ref, bias_ref, o_ref):
    """Streaming pass: y = x + bias."""
    o_ref[...] = x_ref[...] + bias_ref[...].astype(o_ref.dtype)


def batch_norm_block(x, gamma, beta, bias, use_bn=True, eps=EPS):
    """Forward of BatchNormBlock. x: [N, C]; gamma/beta/bias: [C]."""
    n, c = x.shape
    cp = _round_up(c, 128)                       # lane-dense last dim
    tn = _choose_tile_rows(n, cp, x.dtype.itemsize)
    n_pad = _round_up(n, tn)
    grid = (n_pad // tn,)

    xp = x
    if (n_pad, cp) != (n, c):
        xp = jnp.pad(x, ((0, n_pad - n), (0, cp - c)))   # zero pad; harmless to stats

    x_spec = pl.BlockSpec((tn, cp), lambda i: (i, 0))
    vec_spec = pl.BlockSpec((1, cp), lambda i: (0, 0))   # resident across all grid steps

    if use_bn:
        # Pass 1: per-channel [sum, sum_sq] in f32 (reduction over the N grid axis).
        stats = pl.pallas_call(
            _stats_kernel,
            out_shape=jax.ShapeDtypeStruct((2, cp), jnp.float32),
            grid=grid,
            in_specs=[x_spec],
            out_specs=pl.BlockSpec((2, cp), lambda i: (0, 0)),
            compiler_params=pltpu.CompilerParams(
                dimension_semantics=("arbitrary",),
                vmem_limit_bytes=_VMEM_LIMIT),
        )(xp)

        # Fold per-channel scale/shift once (tiny [C]-sized math in the wrapper).
        # Note: E[x^2] - mean^2 in f32; acceptable for normalized point features.
        inv_n = 1.0 / n                                      # divide by the TRUE N
        mean = stats[0] * inv_n
        var = jnp.maximum(stats[1] * inv_n - mean * mean, 0.0)   # biased variance
        inv_std = lax.rsqrt(var + eps)
        gp = jnp.pad(gamma.astype(jnp.float32), (0, cp - c))
        bp = jnp.pad(beta.astype(jnp.float32), (0, cp - c))
        scale_c = gp * inv_std
        shift_c = bp - mean * scale_c
        scale = scale_c.reshape(1, cp)
        shift = shift_c.reshape(1, cp)

        # Pass 2: y = x * scale + shift (one FMA per element, parallel streaming).
        yp = pl.pallas_call(
            _affine_kernel,
            out_shape=jax.ShapeDtypeStruct((n_pad, cp), x.dtype),
            grid=grid,
            in_specs=[x_spec, vec_spec, vec_spec],
            out_specs=x_spec,
            compiler_params=pltpu.CompilerParams(
                dimension_semantics=("parallel",),
                vmem_limit_bytes=_VMEM_LIMIT),
        )(xp, scale, shift)
    else:
        bias_p = jnp.pad(bias.astype(jnp.float32), (0, cp - c)).reshape(1, cp)
        # TODO(synk): could alias x into the output (input_output_aliases) when the
        # caller does not reuse x, to avoid a second N-by-C HBM buffer.
        yp = pl.pallas_call(
            _bias_kernel,
            out_shape=jax.ShapeDtypeStruct((n_pad, cp), x.dtype),
            grid=grid,
            in_specs=[x_spec, vec_spec],
            out_specs=x_spec,
            compiler_params=pltpu.CompilerParams(
                dimension_semantics=("parallel",),
                vmem_limit_bytes=_VMEM_LIMIT),
        )(xp, bias_p)

    if (n_pad, cp) != (n, c):
        yp = yp[:n, :c]
    return yp


def _reference(x, gamma, beta, bias, use_bn=True):
    if use_bn:
        mean = jnp.mean(x, axis=0, keepdims=True)
        var = jnp.mean((x - mean) ** 2, axis=0, keepdims=True)
        return (x - mean) / jnp.sqrt(var + EPS) * gamma + beta
    return x + bias


if __name__ == "__main__":
    key = jax.random.PRNGKey(0)
    k1, k2 = jax.random.split(key)

    # Case 1: lane-dense channels (C multiple of 128), N not a tile multiple
    # -> exercises multi-step stats accumulation and N zero-padding.
    n1, c1 = 3000, 128
    x1 = jax.random.normal(k1, (n1, c1), dtype=jnp.float32) * 2.0 + 0.5
    gamma1 = jnp.ones((c1,), jnp.float32)    # BN weight init
    beta1 = jnp.zeros((c1,), jnp.float32)    # BN bias init
    bias1 = jnp.zeros((c1,), jnp.float32)    # only-bias path parameter

    y1 = jax.block_until_ready(batch_norm_block(x1, gamma1, beta1, bias1, use_bn=True))
    r1 = _reference(x1, gamma1, beta1, bias1, use_bn=True)
    assert jnp.allclose(y1, r1, atol=5e-4, rtol=5e-4), "BN path mismatch (C=128)"

    y1b = jax.block_until_ready(batch_norm_block(x1, gamma1, beta1, bias1, use_bn=False))
    assert jnp.allclose(y1b, _reference(x1, gamma1, beta1, bias1, use_bn=False), atol=1e-6)

    # Case 2: small, lane-unaligned shapes -> exercises the channel-padding path.
    n2, c2 = 200, 32
    x2 = jax.random.normal(k2, (n2, c2), dtype=jnp.float32) * 1.5 - 0.25
    gamma2 = jnp.ones((c2,), jnp.float32)
    beta2 = jnp.zeros((c2,), jnp.float32)
    bias2 = jnp.zeros((c2,), jnp.float32)

    y2 = jax.block_until_ready(batch_norm_block(x2, gamma2, beta2, bias2, use_bn=True))
    r2 = _reference(x2, gamma2, beta2, bias2, use_bn=True)
    assert jnp.allclose(y2, r2, atol=5e-4, rtol=5e-4), "BN path mismatch (C=32)"

    y2b = jax.block_until_ready(batch_norm_block(x2, gamma2, beta2, bias2, use_bn=False))
    assert jnp.allclose(y2b, _reference(x2, gamma2, beta2, bias2, use_bn=False), atol=1e-6)

    print("KERNEL_OK")
</pallas_src>

<mosaic_0001>
module attributes {stable_mosaic.version = 11 : i64} {
  func.func @_stats_kernel(%arg0: i32, %arg1: memref<2048x128xf32, #tpu.memory_space<vmem>>, %arg2: memref<2x128xf32, #tpu.memory_space<vmem>>) attributes {dimension_semantics = [#tpu.dimension_semantics<arbitrary>], iteration_bounds = array<i64: 2>, scalar_prefetch = 0 : i64, scratch_operands = 0 : i64, tpu.core_type = #tpu.core_type<tc>, window_params = [{transform_indices = @transform_0, window_bounds = array<i64: 2048, 128>}, {pipeline_mode = #tpu.pipeline_mode<synchronous>, transform_indices = @transform_1, window_bounds = array<i64: 2, 128>}]} {
    %c0_i32 = arith.constant 0 : i32
    %0 = arith.cmpi eq, %arg0, %c0_i32 : i32
    %1 = arith.extui %0 : i1 to i32
    %c0_i32_0 = arith.constant 0 : i32
    %2 = arith.cmpi ne, %1, %c0_i32_0 : i32
    scf.if %2 {
      %cst_8 = arith.constant 0.000000e+00 : f32
      %12 = vector.broadcast %cst_8 : f32 to vector<2x128xf32>
      %c0_9 = arith.constant 0 : index
      %c0_10 = arith.constant 0 : index
      %13 = vector.load %arg2[%c0_9, %c0_10] : memref<2x128xf32, #tpu.memory_space<vmem>>, vector<2x128xf32>
      tpu.vector_store %arg2[%c0_9, %c0_10], %12 {strides = array<i32>} : memref<2x128xf32, #tpu.memory_space<vmem>>, vector<2x128xf32>,
    } else {
    }
    %c0 = arith.constant 0 : index
    %c0_1 = arith.constant 0 : index
    %3 = vector.load %arg1[%c0, %c0_1] : memref<2048x128xf32, #tpu.memory_space<vmem>>, vector<2048x128xf32>
    %cst = arith.constant 1.000000e+00 : f32
    %4 = vector.broadcast %cst : f32 to vector<1x2048xf32>
    %cst_2 = arith.constant dense<0.000000e+00> : vector<1x128xf32>
    %5 = tpu.matmul %4, %3, %cst_2 {dimension_numbers = #tpu.dot_dimension_numbers<[1], [0], [0], [1], [0, 0, 1, 1], [], []>} : vector<1x2048xf32>, vector<2048x128xf32>, vector<1x128xf32> -> vector<1x128xf32>
    %6 = arith.mulf %3, %3 : vector<2048x128xf32>
    %cst_3 = arith.constant dense<0.000000e+00> : vector<1x128xf32>
    %7 = tpu.matmul %4, %6, %cst_3 {dimension_numbers = #tpu.dot_dimension_numbers<[1], [0], [0], [1], [0, 0, 1, 1], [], []>} : vector<1x2048xf32>, vector<2048x128xf32>, vector<1x128xf32> -> vector<1x128xf32>
    %c0_4 = arith.constant 0 : index
    %c0_5 = arith.constant 0 : index
    %8 = vector.load %arg2[%c0_4, %c0_5] : memref<2x128xf32, #tpu.memory_space<vmem>>, vector<2x128xf32>
    %9 = tpu.concatenate %5, %7 in 0 : vector<1x128xf32>, vector<1x128xf32> -> vector<2x128xf32>
    %10 = arith.addf %8, %9 : vector<2x128xf32>
    %c0_6 = arith.constant 0 : index
    %c0_7 = arith.constant 0 : index
    %11 = vector.load %arg2[%c0_6, %c0_7] : memref<2x128xf32, #tpu.memory_space<vmem>>, vector<2x128xf32>
    tpu.vector_store %arg2[%c0_6, %c0_7], %10 {strides = array<i32>} : memref<2x128xf32, #tpu.memory_space<vmem>>, vector<2x128xf32>,
    return
  }
  func.func @transform_0(%arg0: i32) -> (i32, i32) {
    %c0_i32 = arith.constant 0 : i32
    %c0_i32_0 = arith.constant 0 : i32
    return %arg0, %c0_i32 : i32, i32
  }
  func.func @transform_1(%arg0: i32) -> (i32, i32) {
    %c0_i32 = arith.constant 0 : i32
    %c0_i32_0 = arith.constant 0 : i32
    %c0_i32_1 = arith.constant 0 : i32
    return %c0_i32, %c0_i32_0 : i32, i32
  }
}

</mosaic_0001>

<llo_original>
// kernel: tpu_custom_call.1
$region0: #{tpu_custom_call.1}
  #allocation0 [shape = 'u32[]', space=smem, size = 0x4, offset = 0x4, fixed_abs, tag = 'smem constant byte address 0x4 - core index']
  #allocation1 [shape = 'u32[72,128]{1,0:T(1,128)}', space=vmem, size = 0x9000, scoped, tag = 'internal scratch']
  %s0 = inlined_call_operand.hbm [shape: f32[4096,128], index: 0, kind: input, shape index: {}]
  %s1 = inlined_call_operand.hbm [shape: f32[2,128], index: 1, kind: output, shape index: {}]
  %s2 = sld [smem:[#allocation0]]
  $region45: #{tpu_custom_call.1} parent=0
    _
  %s4 = ssub.s32 1, %s2
  %s5 = scalar_select 0, %s4, %s2
  $region1: #{tpu_custom_call.1} parent=0
    #allocation2 [shape = 'u8[2097152]{0}', space=vmem, size = 0x200000, scoped, tag = 'input window, operand 0']
    #allocation3 [shape = 's32[2]{0}', space=sflag, size = 0x8, scoped, tag = 'scoped memory for tpu_custom_call.1']
    #allocation4 [shape = 's32[2]{0}', space=sflag, size = 0x8, scoped, tag = 'scoped memory for tpu_custom_call.1']
    #allocation5 [shape = 'u8[1024]{0}', space=vmem, size = 0x400, scoped, tag = 'output window, operand 0, single buffered']
    %6 = vsyncpa [#allocation3], 0
    %s7 = scalar_lea.sflag [#allocation3], 1
    %8 = vsyncpa %s7, 0
    %9 = vsyncpa [#allocation4], 0
    loop: start=0, step=1, limit=4
    $region2: #{tpu_custom_call.1} parent=1 // loop_pre_header
      _
    $region3: #{tpu_custom_call.1} parent=1 // loop_header
      %s11 = sphi 0, %s15
      %p12 = scmp.ge.s32.totalorder %s11, 4
      %s21 = sphi 0, %s23
      %s24 = sphi 0, %s21
      %s25 = sphi 0, %s24
      %s41 = sphi 0, %s25
      %s45 = sphi 0, %s45
      %s47 = sphi 0, %s45
      %s48 = sphi 0, %s47
      %s62 = sphi 0, %s48
    $region4: #{tpu_custom_call.1} parent=1 // loop_header_branch
      %14 = sbr.rel (%p12) target = $region8
    $region5: #{tpu_custom_call.1} parent=1 // loop_body
      %s16 = ssub.s32 %s11, 1
      %s17 = ssub.s32 %s11, 2
      %s18 = sadd.s32 %s11, 1
      %s19 = ssub.s32 %s11, %s18
      %p20 = scmp.eq.s32.totalorder %s19, 0
      %s22 = sadd.s32 %s21, 1
      %s23 = scalar_select %p20, %s21, %s22
      %p26 = pneg %p20
      %p27 = scmp.eq.s32.totalorder %s11, 1
      %p28 = por %p26, %p27
      %p29 = scmp.ne.s32.totalorder %s21, %s24
      %p30 = scmp.eq.s32.totalorder %s11, 0
      %p31 = por %p29, %p30
      %p32 = scmp.ne.s32.totalorder %s21, %s24
      %p33 = scmp.eq.s32.totalorder %s16, 1
      %p34 = por %p32, %p33
      %p35 = scmp.ne.s32.totalorder %s24, %s25
      %p36 = scmp.eq.s32.totalorder %s16, 0
      %p37 = por %p35, %p36
      %p38 = scmp.ne.s32.totalorder %s24, %s25
      %p39 = scmp.eq.s32.totalorder %s17, 1
      %p40 = por %p38, %p39
      %p42 = scmp.ne.s32.totalorder %s25, %s41
      %p43 = scmp.eq.s32.totalorder %s17, 0
      %p44 = por %p42, %p43
      %s46 = sadd.s32 %s45, 1
      %p49 = scmp.eq.s32.totalorder %s11, 1
      %p50 = scmp.ne.s32.totalorder %s45, %s47
      %p51 = scmp.eq.s32.totalorder %s11, 0
      %p52 = por %p50, %p51
      %p53 = scmp.ne.s32.totalorder %s45, %s47
      %p54 = scmp.eq.s32.totalorder %s16, 1
      %p55 = por %p53, %p54
      %p56 = scmp.ne.s32.totalorder %s47, %s48
      %p57 = scmp.eq.s32.totalorder %s16, 0
      %p58 = por %p56, %p57
      %p59 = scmp.ne.s32.totalorder %s47, %s48
      %p60 = scmp.eq.s32.totalorder %s17, 1
      %p61 = por %p59, %p60
      %p63 = scmp.ne.s32.totalorder %s48, %s62
      %p64 = scmp.eq.s32.totalorder %s17, 0
      %p65 = por %p63, %p64
      %p66 = scmp.le.s32.totalorder 1, %s11
      %p67 = scmp.lt.s32.totalorder %s11, 3
      %p68 = pnand %p66, %p67
      %p69 = pneg %p68
      // Predicated region
      $region9: #{tpu_custom_call.1} parent=5 // pred_check
        _
      $region10: #{tpu_custom_call.1} parent=5 // pred_check_branch
        %71 = sbr.rel (%p68) target = $region12
      $region11: #{tpu_custom_call.1} parent=5 // pred_region
        %s72 = ssub.s32 %s11, 1
      $region12: #{tpu_custom_call.1} parent=5 // pred_fallthru
        _
      %p73 = scmp.lt.s32.totalorder %s11, 2
      // Predicated region
      $region13: #{tpu_custom_call.1} parent=5 // pred_check
        %p74 = pneg %p73
      $region14: #{tpu_custom_call.1} parent=5 // pred_check_branch
        %76 = sbr.rel (%p74) target = $region16
      $region15: #{tpu_custom_call.1} parent=5 // pred_region
        // Predicated region
        $region17: #{tpu_custom_call.1} parent=15 // pred_check
          %p77 = pneg %p31
        $region18: #{tpu_custom_call.1} parent=15 // pred_check_branch
          %79 = sbr.rel (%p77) target = $region20
        $region19: #{tpu_custom_call.1} parent=15 // pred_region
          %s80 = sand.u32 %s21, 1
          %s81 = scalar_lea.sflag [#allocation3], %s80
          %s82 = sand.u32 %s21, 1
          %s83 = smul.addr %s82, 2048
          %s84 = scalar_lea.vmem [#allocation2], %s83
          %s85 = smul.u32 256, %s11
          %87 = vsyncadd %s81, 0
          %s88 = smul.addr %s85, 8
          %s89 = scalar_lea.hbm %s0, %s88
          %s90 = sshll.u32 %s89, 4
          %s91 = int_to_ptr.hbm [resolvable:$true] %s90
          %s92 = sshll.u32 %s84, 4
          %s93 = int_to_ptr.vmem [resolvable:$true] %s92
          %98 = dma.hbm_to_vmem [thread:$0]  %s91, 32768, %s93, %s81, 128, 128, 8
        $region20: #{tpu_custom_call.1} parent=15 // pred_fallthru
          _
      $region16: #{tpu_custom_call.1} parent=5 // pred_fallthru
        _
      %p99 = scmp.le.s32.totalorder 1, %s11
      %p100 = scmp.lt.s32.totalorder %s11, 3
      %p101 = pnand %p99, %p100
      %p102 = pneg %p101
      // Predicated region
      $region21: #{tpu_custom_call.1} parent=5 // pred_check
        _
      $region22: #{tpu_custom_call.1} parent=5 // pred_check_branch
        %104 = sbr.rel (%p101) target = $region24
      $region23: #{tpu_custom_call.1} parent=5 // pred_region
        %s105 = ssub.s32 %s11, 1
        %s106 = sand.u32 %s24, 1
        %s107 = scalar_lea.sflag [#allocation3], %s106
        %s108 = sand.u32 %s24, 1
        %s109 = smul.addr %s108, 2048
        %s110 = scalar_lea.vmem [#allocation2], %s109
        // Predicated region
        $region25: #{tpu_custom_call.1} parent=23 // pred_check
          %p111 = pneg %p37
        $region26: #{tpu_custom_call.1} parent=23 // pred_check_branch
          %113 = sbr.rel (%p111) target = $region28
        $region27: #{tpu_custom_call.1} parent=23 // pred_region
          %115 = dma.done %s107, 32768
        $region28: #{tpu_custom_call.1} parent=23 // pred_fallthru
          _
        %s116 = sand.u32 %s24, 1
        %s117 = scalar_lea.sflag [#allocation3], %s116
        %s118 = sand.u32 %s24, 1
        %s119 = smul.addr %s118, 2048
        %s120 = scalar_lea.vmem [#allocation2], %s119
        %p121 = pneg %p37
        %p122 = pneg %p34
        %p123 = pneg %p58
        %p124 = pneg %p55
        %s125 = smul.u32 256, %s16
        %p126 = scmp.eq.s32.totalorder %s16, 0
        // Predicated region
        $region29: #{tpu_custom_call.1} parent=23 // pred_check
          %p127 = pneg %p126
        $region30: #{tpu_custom_call.1} parent=23 // pred_check_branch
          %129 = sbr.rel (%p127) target = $region32
        $region31: #{tpu_custom_call.1} parent=23 // pred_region
          %130 = vst [vmem:[#allocation5] sm:$0x3] 0.0
        $region32: #{tpu_custom_call.1} parent=23 // pred_fallthru
          _
        %v131 = vld [vmem:[%s110] sm:$0xff]
        %v132 = vld [vmem:[%s110 + $0x8] sm:$0xff]
        %v133 = vld [vmem:[%s110 + $0x10] sm:$0xff]
        %v134 = vld [vmem:[%s110 + $0x18] sm:$0xff]
        %v135 = vld [vmem:[%s110 + $0x20] sm:$0xff]
        %v136 = vld [vmem:[%s110 + $0x28] sm:$0xff]
        %v137 = vld [vmem:[%s110 + $0x30] sm:$0xff]
        %v138 = vld [vmem:[%s110 + $0x38] sm:$0xff]
        %v139 = vld [vmem:[%s110 + $0x40] sm:$0xff]
        %v140 = vld [vmem:[%s110 + $0x48] sm:$0xff]
        %v141 = vld [vmem:[%s110 + $0x50] sm:$0xff]
        %v142 = vld [vmem:[%s110 + $0x58] sm:$0xff]
        %v143 = vld [vmem:[%s110 + $0x60] sm:$0xff]
        %v144 = vld [vmem:[%s110 + $0x68] sm:$0xff]
        %v145 = vld [vmem:[%s110 + $0x70] sm:$0xff]
        %v146 = vld [vmem:[%s110 + $0x78] sm:$0xff]
        %v147 = vld [vmem:[%s110 + $0x80] sm:$0xff]
        %v148 = vld [vmem:[%s110 + $0x88] sm:$0xff]
        %v149 = vld [vmem:[%s110 + $0x90] sm:$0xff]
        %v150 = vld [vmem:[%s110 + $0x98] sm:$0xff]
        %v151 = vld [vmem:[%s110 + $0xa0] sm:$0xff]
        %v152 = vld [vmem:[%s110 + $0xa8] sm:$0xff]
        %v153 = vld [vmem:[%s110 + $0xb0] sm:$0xff]
        %v154 = vld [vmem:[%s110 + $0xb8] sm:$0xff]
        %v155 = vld [vmem:[%s110 + $0xc0] sm:$0xff]
        %v156 = vld [vmem:[%s110 + $0xc8] sm:$0xff]
        %v157 = vld [vmem:[%s110 + $0xd0] sm:$0xff]
        %v158 = vld [vmem:[%s110 + $0xd8] sm:$0xff]
        %v159 = vld [vmem:[%s110 + $0xe0] sm:$0xff]
        %v160 = vld [vmem:[%s110 + $0xe8] sm:$0xff]
        %v161 = vld [vmem:[%s110 + $0xf0] sm:$0xff]
        %v162 = vld [vmem:[%s110 + $0xf8] sm:$0xff]
        %v163 = vld [vmem:[%s110 + $0x100] sm:$0xff]
        %v164 = vld [vmem:[%s110 + $0x108] sm:$0xff]
        %v165 = vld [vmem:[%s110 + $0x110] sm:$0xff]
        %v166 = vld [vmem:[%s110 + $0x118] sm:$0xff]
        %v167 = vld [vmem:[%s110 + $0x120] sm:$0xff]
        %v168 = vld [vmem:[%s110 + $0x128] sm:$0xff]
        %v169 = vld [vmem:[%s110 + $0x130] sm:$0xff]
        %v170 = vld [vmem:[%s110 + $0x138] sm:$0xff]
        %v171 = vld [vmem:[%s110 + $0x140] sm:$0xff]
        %v172 = vld [vmem:[%s110 + $0x148] sm:$0xff]
        %v173 = vld [vmem:[%s110 + $0x150] sm:$0xff]
        %v174 = vld [vmem:[%s110 + $0x158] sm:$0xff]
        %v175 = vld [vmem:[%s110 + $0x160] sm:$0xff]
        %v176 = vld [vmem:[%s110 + $0x168] sm:$0xff]
        %v177 = vld [vmem:[%s110 + $0x170] sm:$0xff]
        %v178 = vld [vmem:[%s110 + $0x178] sm:$0xff]
        %v179 = vld [vmem:[%s110 + $0x180] sm:$0xff]
        %v180 = vld [vmem:[%s110 + $0x188] sm:$0xff]
        %v181 = vld [vmem:[%s110 + $0x190] sm:$0xff]
        %v182 = vld [vmem:[%s110 + $0x198] sm:$0xff]
        %v183 = vld [vmem:[%s110 + $0x1a0] sm:$0xff]
        %v184 = vld [vmem:[%s110 + $0x1a8] sm:$0xff]
        %v185 = vld [vmem:[%s110 + $0x1b0] sm:$0xff]
        %v186 = vld [vmem:[%s110 + $0x1b8] sm:$0xff]
        %v187 = vld [vmem:[%s110 + $0x1c0] sm:$0xff]
        %v188 = vld [vmem:[%s110 + $0x1c8] sm:$0xff]
        %v189 = vld [vmem:[%s110 + $0x1d0] sm:$0xff]
        %v190 = vld [vmem:[%s110 + $0x1d8] sm:$0xff]
        %v191 = vld [vmem:[%s110 + $0x1e0] sm:$0xff]
        %v192 = vld [vmem:[%s110 + $0x1e8] sm:$0xff]
        %v193 = vld [vmem:[%s110 + $0x1f0] sm:$0xff]
        %v194 = vld [vmem:[%s110 + $0x1f8] sm:$0xff]
        %v195 = vld [vmem:[%s110 + $0x200] sm:$0xff]
        %v196 = vld [vmem:[%s110 + $0x208] sm:$0xff]
        %v197 = vld [vmem:[%s110 + $0x210] sm:$0xff]
        %v198 = vld [vmem:[%s110 + $0x218] sm:$0xff]
        %v199 = vld [vmem:[%s110 + $0x220] sm:$0xff]
        %v200 = vld [vmem:[%s110 + $0x228] sm:$0xff]
        %v201 = vld [vmem:[%s110 + $0x230] sm:$0xff]
        %v202 = vld [vmem:[%s110 + $0x238] sm:$0xff]
        %v203 = vld [vmem:[%s110 + $0x240] sm:$0xff]
        %v204 = vld [vmem:[%s110 + $0x248] sm:$0xff]
        %v205 = vld [vmem:[%s110 + $0x250] sm:$0xff]
        %v206 = vld [vmem:[%s110 + $0x258] sm:$0xff]
        %v207 = vld [vmem:[%s110 + $0x260] sm:$0xff]
        %v208 = vld [vmem:[%s110 + $0x268] sm:$0xff]
        %v209 = vld [vmem:[%s110 + $0x270] sm:$0xff]
        %v210 = vld [vmem:[%s110 + $0x278] sm:$0xff]
        %v211 = vld [vmem:[%s110 + $0x280] sm:$0xff]
        %v212 = vld [vmem:[%s110 + $0x288] sm:$0xff]
        %v213 = vld [vmem:[%s110 + $0x290] sm:$0xff]
        %v214 = vld [vmem:[%s110 + $0x298] sm:$0xff]
        %v215 = vld [vmem:[%s110 + $0x2a0] sm:$0xff]
        %v216 = vld [vmem:[%s110 + $0x2a8] sm:$0xff]
        %v217 = vld [vmem:[%s110 + $0x2b0] sm:$0xff]
        %v218 = vld [vmem:[%s110 + $0x2b8] sm:$0xff]
        %v219 = vld [vmem:[%s110 + $0x2c0] sm:$0xff]
        %v220 = vld [vmem:[%s110 + $0x2c8] sm:$0xff]
        %v221 = vld [vmem:[%s110 + $0x2d0] sm:$0xff]
        %v222 = vld [vmem:[%s110 + $0x2d8] sm:$0xff]
        %v223 = vld [vmem:[%s110 + $0x2e0] sm:$0xff]
        %v224 = vld [vmem:[%s110 + $0x2e8] sm:$0xff]
        %v225 = vld [vmem:[%s110 + $0x2f0] sm:$0xff]
        %v226 = vld [vmem:[%s110 + $0x2f8] sm:$0xff]
        %v227 = vld [vmem:[%s110 + $0x300] sm:$0xff]
        %v228 = vld [vmem:[%s110 + $0x308] sm:$0xff]
        %v229 = vld [vmem:[%s110 + $0x310] sm:$0xff]
        %v230 = vld [vmem:[%s110 + $0x318] sm:$0xff]
        %v231 = vld [vmem:[%s110 + $0x320] sm:$0xff]
        %v232 = vld [vmem:[%s110 + $0x328] sm:$0xff]
        %v233 = vld [vmem:[%s110 + $0x330] sm:$0xff]
        %v234 = vld [vmem:[%s110 + $0x338] sm:$0xff]
        %v235 = vld [vmem:[%s110 + $0x340] sm:$0xff]
        %v236 = vld [vmem:[%s110 + $0x348] sm:$0xff]
        %v237 = vld [vmem:[%s110 + $0x350] sm:$0xff]
        %v238 = vld [vmem:[%s110 + $0x358] sm:$0xff]
        %v239 = vld [vmem:[%s110 + $0x360] sm:$0xff]
        %v240 = vld [vmem:[%s110 + $0x368] sm:$0xff]
        %v241 = vld [vmem:[%s110 + $0x370] sm:$0xff]
        %v242 = vld [vmem:[%s110 + $0x378] sm:$0xff]
        %v243 = vld [vmem:[%s110 + $0x380] sm:$0xff]
        %v244 = vld [vmem:[%s110 + $0x388] sm:$0xff]
        %v245 = vld [vmem:[%s110 + $0x390] sm:$0xff]
        %v246 = vld [vmem:[%s110 + $0x398] sm:$0xff]
        %v247 = vld [vmem:[%s110 + $0x3a0] sm:$0xff]
        %v248 = vld [vmem:[%s110 + $0x3a8] sm:$0xff]
        %v249 = vld [vmem:[%s110 + $0x3b0] sm:$0xff]
        %v250 = vld [vmem:[%s110 + $0x3b8] sm:$0xff]
        %v251 = vld [vmem:[%s110 + $0x3c0] sm:$0xff]
        %v252 = vld [vmem:[%s110 + $0x3c8] sm:$0xff]
        %v253 = vld [vmem:[%s110 + $0x3d0] sm:$0xff]
        %v254 = vld [vmem:[%s110 + $0x3d8] sm:$0xff]
        %v255 = vld [vmem:[%s110 + $0x3e0] sm:$0xff]
        %v256 = vld [vmem:[%s110 + $0x3e8] sm:$0xff]
        %v257 = vld [vmem:[%s110 + $0x3f0] sm:$0xff]
        %v258 = vld [vmem:[%s110 + $0x3f8] sm:$0xff]
        %v259 = vld [vmem:[%s110 + $0x400] sm:$0xff]
        %v260 = vld [vmem:[%s110 + $0x408] sm:$0xff]
        %v261 = vld [vmem:[%s110 + $0x410] sm:$0xff]
        %v262 = vld [vmem:[%s110 + $0x418] sm:$0xff]
        %v263 = vld [vmem:[%s110 + $0x420] sm:$0xff]
        %v264 = vld [vmem:[%s110 + $0x428] sm:$0xff]
        %v265 = vld [vmem:[%s110 + $0x430] sm:$0xff]
        %v266 = vld [vmem:[%s110 + $0x438] sm:$0xff]
        %v267 = vld [vmem:[%s110 + $0x440] sm:$0xff]
        %v268 = vld [vmem:[%s110 + $0x448] sm:$0xff]
        %v269 = vld [vmem:[%s110 + $0x450] sm:$0xff]
        %v270 = vld [vmem:[%s110 + $0x458] sm:$0xff]
        %v271 = vld [vmem:[%s110 + $0x460] sm:$0xff]
        %v272 = vld [vmem:[%s110 + $0x468] sm:$0xff]
        %v273 = vld [vmem:[%s110 + $0x470] sm:$0xff]
        %v274 = vld [vmem:[%s110 + $0x478] sm:$0xff]
        %v275 = vld [vmem:[%s110 + $0x480] sm:$0xff]
        %v276 = vld [vmem:[%s110 + $0x488] sm:$0xff]
        %v277 = vld [vmem:[%s110 + $0x490] sm:$0xff]
        %v278 = vld [vmem:[%s110 + $0x498] sm:$0xff]
        %v279 = vld [vmem:[%s110 + $0x4a0] sm:$0xff]
        %v280 = vld [vmem:[%s110 + $0x4a8] sm:$0xff]
        %v281 = vld [vmem:[%s110 + $0x4b0] sm:$0xff]
        %v282 = vld [vmem:[%s110 + $0x4b8] sm:$0xff]
        %v283 = vld [vmem:[%s110 + $0x4c0] sm:$0xff]
        %v284 = vld [vmem:[%s110 + $0x4c8] sm:$0xff]
        %v285 = vld [vmem:[%s110 + $0x4d0] sm:$0xff]
        %v286 = vld [vmem:[%s110 + $0x4d8] sm:$0xff]
        %v287 = vld [vmem:[%s110 + $0x4e0] sm:$0xff]
        %v288 = vld [vmem:[%s110 + $0x4e8] sm:$0xff]
        %v289 = vld [vmem:[%s110 + $0x4f0] sm:$0xff]
        %v290 = vld [vmem:[%s110 + $0x4f8] sm:$0xff]
        %v291 = vld [vmem:[%s110 + $0x500] sm:$0xff]
        %v292 = vld [vmem:[%s110 + $0x508] sm:$0xff]
        %v293 = vld [vmem:[%s110 + $0x510] sm:$0xff]
        %v294 = vld [vmem:[%s110 + $0x518] sm:$0xff]
        %v295 = vld [vmem:[%s110 + $0x520] sm:$0xff]
        %v296 = vld [vmem:[%s110 + $0x528] sm:$0xff]
        %v297 = vld [vmem:[%s110 + $0x530] sm:$0xff]
        %v298 = vld [vmem:[%s110 + $0x538] sm:$0xff]
        %v299 = vld [vmem:[%s110 + $0x540] sm:$0xff]
        %v300 = vld [vmem:[%s110 + $0x548] sm:$0xff]
        %v301 = vld [vmem:[%s110 + $0x550] sm:$0xff]
        %v302 = vld [vmem:[%s110 + $0x558] sm:$0xff]
        %v303 = vld [vmem:[%s110 + $0x560] sm:$0xff]
        %v304 = vld [vmem:[%s110 + $0x568] sm:$0xff]
        %v305 = vld [vmem:[%s110 + $0x570] sm:$0xff]
        %v306 = vld [vmem:[%s110 + $0x578] sm:$0xff]
        %v307 = vld [vmem:[%s110 + $0x580] sm:$0xff]
        %v308 = vld [vmem:[%s110 + $0x588] sm:$0xff]
        %v309 = vld [vmem:[%s110 + $0x590] sm:$0xff]
        %v310 = vld [vmem:[%s110 + $0x598] sm:$0xff]
        %v311 = vld [vmem:[%s110 + $0x5a0] sm:$0xff]
        %v312 = vld [vmem:[%s110 + $0x5a8] sm:$0xff]
        %v313 = vld [vmem:[%s110 + $0x5b0] sm:$0xff]
        %v314 = vld [vmem:[%s110 + $0x5b8] sm:$0xff]
        %v315 = vld [vmem:[%s110 + $0x5c0] sm:$0xff]
        %v316 = vld [vmem:[%s110 + $0x5c8] sm:$0xff]
        %v317 = vld [vmem:[%s110 + $0x5d0] sm:$0xff]
        %v318 = vld [vmem:[%s110 + $0x5d8] sm:$0xff]
        %v319 = vld [vmem:[%s110 + $0x5e0] sm:$0xff]
        %v320 = vld [vmem:[%s110 + $0x5e8] sm:$0xff]
        %v321 = vld [vmem:[%s110 + $0x5f0] sm:$0xff]
        %v322 = vld [vmem:[%s110 + $0x5f8] sm:$0xff]
        %v323 = vld [vmem:[%s110 + $0x600] sm:$0xff]
        %v324 = vld [vmem:[%s110 + $0x608] sm:$0xff]
        %v325 = vld [vmem:[%s110 + $0x610] sm:$0xff]
        %v326 = vld [vmem:[%s110 + $0x618] sm:$0xff]
        %v327 = vld [vmem:[%s110 + $0x620] sm:$0xff]
        %v328 = vld [vmem:[%s110 + $0x628] sm:$0xff]
        %v329 = vld [vmem:[%s110 + $0x630] sm:$0xff]
        %v330 = vld [vmem:[%s110 + $0x638] sm:$0xff]
        %v331 = vld [vmem:[%s110 + $0x640] sm:$0xff]
        %v332 = vld [vmem:[%s110 + $0x648] sm:$0xff]
        %v333 = vld [vmem:[%s110 + $0x650] sm:$0xff]
        %v334 = vld [vmem:[%s110 + $0x658] sm:$0xff]
        %v335 = vld [vmem:[%s110 + $0x660] sm:$0xff]
        %v336 = vld [vmem:[%s110 + $0x668] sm:$0xff]
        %v337 = vld [vmem:[%s110 + $0x670] sm:$0xff]
        %v338 = vld [vmem:[%s110 + $0x678] sm:$0xff]
        %v339 = vld [vmem:[%s110 + $0x680] sm:$0xff]
        %v340 = vld [vmem:[%s110 + $0x688] sm:$0xff]
        %v341 = vld [vmem:[%s110 + $0x690] sm:$0xff]
        %v342 = vld [vmem:[%s110 + $0x698] sm:$0xff]
        %v343 = vld [vmem:[%s110 + $0x6a0] sm:$0xff]
        %v344 = vld [vmem:[%s110 + $0x6a8] sm:$0xff]
        %v345 = vld [vmem:[%s110 + $0x6b0] sm:$0xff]
        %v346 = vld [vmem:[%s110 + $0x6b8] sm:$0xff]
        %v347 = vld [vmem:[%s110 + $0x6c0] sm:$0xff]
        %v348 = vld [vmem:[%s110 + $0x6c8] sm:$0xff]
        %v349 = vld [vmem:[%s110 + $0x6d0] sm:$0xff]
        %v350 = vld [vmem:[%s110 + $0x6d8] sm:$0xff]
        %v351 = vld [vmem:[%s110 + $0x6e0] sm:$0xff]
        %v352 = vld [vmem:[%s110 + $0x6e8] sm:$0xff]
        %v353 = vld [vmem:[%s110 + $0x6f0] sm:$0xff]
        %v354 = vld [vmem:[%s110 + $0x6f8] sm:$0xff]
        %v355 = vld [vmem:[%s110 + $0x700] sm:$0xff]
        %v356 = vld [vmem:[%s110 + $0x708] sm:$0xff]
        %v357 = vld [vmem:[%s110 + $0x710] sm:$0xff]
        %v358 = vld [vmem:[%s110 + $0x718] sm:$0xff]
        %v359 = vld [vmem:[%s110 + $0x720] sm:$0xff]
        %v360 = vld [vmem:[%s110 + $0x728] sm:$0xff]
        %v361 = vld [vmem:[%s110 + $0x730] sm:$0xff]
        %v362 = vld [vmem:[%s110 + $0x738] sm:$0xff]
        %v363 = vld [vmem:[%s110 + $0x740] sm:$0xff]
        %v364 = vld [vmem:[%s110 + $0x748] sm:$0xff]
        %v365 = vld [vmem:[%s110 + $0x750] sm:$0xff]
        %v366 = vld [vmem:[%s110 + $0x758] sm:$0xff]
        %v367 = vld [vmem:[%s110 + $0x760] sm:$0xff]
        %v368 = vld [vmem:[%s110 + $0x768] sm:$0xff]
        %v369 = vld [vmem:[%s110 + $0x770] sm:$0xff]
        %v370 = vld [vmem:[%s110 + $0x778] sm:$0xff]
        %v371 = vld [vmem:[%s110 + $0x780] sm:$0xff]
        %v372 = vld [vmem:[%s110 + $0x788] sm:$0xff]
        %v373 = vld [vmem:[%s110 + $0x790] sm:$0xff]
        %v374 = vld [vmem:[%s110 + $0x798] sm:$0xff]
        %v375 = vld [vmem:[%s110 + $0x7a0] sm:$0xff]
        %v376 = vld [vmem:[%s110 + $0x7a8] sm:$0xff]
        %v377 = vld [vmem:[%s110 + $0x7b0] sm:$0xff]
        %v378 = vld [vmem:[%s110 + $0x7b8] sm:$0xff]
        %v379 = vld [vmem:[%s110 + $0x7c0] sm:$0xff]
        %v380 = vld [vmem:[%s110 + $0x7c8] sm:$0xff]
        %v381 = vld [vmem:[%s110 + $0x7d0] sm:$0xff]
        %v382 = vld [vmem:[%s110 + $0x7d8] sm:$0xff]
        %v383 = vld [vmem:[%s110 + $0x7e0] sm:$0xff]
        %v384 = vld [vmem:[%s110 + $0x7e8] sm:$0xff]
        %v385 = vld [vmem:[%s110 + $0x7f0] sm:$0xff]
        %v386 = vld [vmem:[%s110 + $0x7f8] sm:$0xff]
        %387 = vmatpush.msra.mxu0 %v146
        %388 = vmatpush.msra.mxu0 %v145
        %389 = vmatpush.msra.mxu0 %v144
        %390 = vmatpush.msra.mxu0 %v143
        %391 = vmatpush.msra.mxu0 %v142
        %392 = vmatpush.msra.mxu0 %v141
        %393 = vmatpush.msra.mxu0 %v140
        %394 = vmatpush.msra.mxu0 %v139
        %395 = vmatpush.msra.mxu0 %v138
        %396 = vmatpush.msra.mxu0 %v137
        %397 = vmatpush.msra.mxu0 %v136
        %398 = vmatpush.msra.mxu0 %v135
        %399 = vmatpush.msra.mxu0 %v134
        %400 = vmatpush.msra.mxu0 %v133
        %401 = vmatpush.msra.mxu0 %v132
        %402 = vmatpush.msra.mxu0 %v131
        %403 = vmatmul.f32.gmra.mxu0 1.0
        %v404 = vpop.f32.mrf.mxu0
        %v405 = vadd.f32 0.0, %v404
        %406 = vdwg.mxu0
        %407 = vmatpush.msra.mxu0 %v162
        %408 = vmatpush.msra.mxu0 %v161
        %409 = vmatpush.msra.mxu0 %v160
        %410 = vmatpush.msra.mxu0 %v159
        %411 = vmatpush.msra.mxu0 %v158
        %412 = vmatpush.msra.mxu0 %v157
        %413 = vmatpush.msra.mxu0 %v156
        %414 = vmatpush.msra.mxu0 %v155
        %415 = vmatpush.msra.mxu0 %v154
        %416 = vmatpush.msra.mxu0 %v153
        %417 = vmatpush.msra.mxu0 %v152
        %418 = vmatpush.msra.mxu0 %v151
        %419 = vmatpush.msra.mxu0 %v150
        %420 = vmatpush.msra.mxu0 %v149
        %421 = vmatpush.msra.mxu0 %v148
        %422 = vmatpush.msra.mxu0 %v147
        %423 = vmatmul.f32.gmra.mxu0 1.0
        %v424 = vpop.f32.mrf.mxu0
        %v425 = vadd.f32 %v405, %v424
        %426 = vdwg.mxu0
        %427 = vmatpush.msra.mxu0 %v178
        %428 = vmatpush.msra.mxu0 %v177
        %429 = vmatpush.msra.mxu0 %v176
        %430 = vmatpush.msra.mxu0 %v175
        %431 = vmatpush.msra.mxu0 %v174
        %432 = vmatpush.msra.mxu0 %v173
        %433 = vmatpush.msra.mxu0 %v172
        %434 = vmatpush.msra.mxu0 %v171
        %435 = vmatpush.msra.mxu0 %v170
        %436 = vmatpush.msra.mxu0 %v169
        %437 = vmatpush.msra.mxu0 %v168
        %438 = vmatpush.msra.mxu0 %v167
        %439 = vmatpush.msra.mxu0 %v166
        %440 = vmatpush.msra.mxu0 %v165
        %441 = vmatpush.msra.mxu0 %v164
        %442 = vmatpush.msra.mxu0 %v163
        %443 = vmatmul.f32.gmra.mxu0 1.0
        %v444 = vpop.f32.mrf.mxu0
        %v445 = vadd.f32 %v425, %v444
        %446 = vdwg.mxu0
        %447 = vmatpush.msra.mxu0 %v194
        %448 = vmatpush.msra.mxu0 %v193
        %449 = vmatpush.msra.mxu0 %v192
        %450 = vmatpush.msra.mxu0 %v191
        %451 = vmatpush.msra.mxu0 %v190
        %452 = vmatpush.msra.mxu0 %v189
        %453 = vmatpush.msra.mxu0 %v188
        %454 = vmatpush.msra.mxu0 %v187
        %455 = vmatpush.msra.mxu0 %v186
        %456 = vmatpush.msra.mxu0 %v185
        %457 = vmatpush.msra.mxu0 %v184
        %458 = vmatpush.msra.mxu0 %v183
        %459 = vmatpush.msra.mxu0 %v182
        %460 = vmatpush.msra.mxu0 %v181
        %461 = vmatpush.msra.mxu0 %v180
        %462 = vmatpush.msra.mxu0 %v179
        %463 = vmatmul.f32.gmra.mxu0 1.0
        %v464 = vpop.f32.mrf.mxu0
        %v465 = vadd.f32 %v445, %v464
        %466 = vdwg.mxu0
        %467 = vmatpush.msra.mxu0 %v210
        %468 = vmatpush.msra.mxu0 %v209
        %469 = vmatpush.msra.mxu0 %v208
        %470 = vmatpush.msra.mxu0 %v207
        %471 = vmatpush.msra.mxu0 %v206
        %472 = vmatpush.msra.mxu0 %v205
        %473 = vmatpush.msra.mxu0 %v204
        %474 = vmatpush.msra.mxu0 %v203
        %475 = vmatpush.msra.mxu0 %v202
        %476 = vmatpush.msra.mxu0 %v201
        %477 = vmatpush.msra.mxu0 %v200
        %478 = vmatpush.msra.mxu0 %v199
        %479 = vmatpush.msra.mxu0 %v198
        %480 = vmatpush.msra.mxu0 %v197
        %481 = vmatpush.msra.mxu0 %v196
        %482 = vmatpush.msra.mxu0 %v195
        %483 = vmatmul.f32.gmra.mxu0 1.0
        %v484 = vpop.f32.mrf.mxu0
        %v485 = vadd.f32 %v465, %v484
        %486 = vdwg.mxu0
        %487 = vmatpush.msra.mxu0 %v226
        %488 = vmatpush.msra.mxu0 %v225
        %489 = vmatpush.msra.mxu0 %v224
        %490 = vmatpush.msra.mxu0 %v223
        %491 = vmatpush.msra.mxu0 %v222
        %492 = vmatpush.msra.mxu0 %v221
        %493 = vmatpush.msra.mxu0 %v220
        %494 = vmatpush.msra.mxu0 %v219
        %495 = vmatpush.msra.mxu0 %v218
        %496 = vmatpush.msra.mxu0 %v217
        %497 = vmatpush.msra.mxu0 %v216
        %498 = vmatpush.msra.mxu0 %v215
        %499 = vmatpush.msra.mxu0 %v214
        %500 = vmatpush.msra.mxu0 %v213
        %501 = vmatpush.msra.mxu0 %v212
        %502 = vmatpush.msra.mxu0 %v211
        %503 = vmatmul.f32.gmra.mxu0 1.0
        %v504 = vpop.f32.mrf.mxu0
        %v505 = vadd.f32 %v485, %v504
        %506 = vdwg.mxu0
        %507 = vmatpush.msra.mxu0 %v242
        %508 = vmatpush.msra.mxu0 %v241
        %509 = vmatpush.msra.mxu0 %v240
        %510 = vmatpush.msra.mxu0 %v239
        %511 = vmatpush.msra.mxu0 %v238
        %512 = vmatpush.msra.mxu0 %v237
        %513 = vmatpush.msra.mxu0 %v236
        %514 = vmatpush.msra.mxu0 %v235
        %515 = vmatpush.msra.mxu0 %v234
        %516 = vmatpush.msra.mxu0 %v233
        %517 = vmatpush.msra.mxu0 %v232
        %518 = vmatpush.msra.mxu0 %v231
        %519 = vmatpush.msra.mxu0 %v230
        %520 = vmatpush.msra.mxu0 %v229
        %521 = vmatpush.msra.mxu0 %v228
        %522 = vmatpush.msra.mxu0 %v227
        %523 = vmatmul.f32.gmra.mxu0 1.0
        %v524 = vpop.f32.mrf.mxu0
        %v525 = vadd.f32 %v505, %v524
        %526 = vdwg.mxu0
        %527 = vmatpush.msra.mxu0 %v258
        %528 = vmatpush.msra.mxu0 %v257
        %529 = vmatpush.msra.mxu0 %v256
        %530 = vmatpush.msra.mxu0 %v255
        %531 = vmatpush.msra.mxu0 %v254
        %532 = vmatpush.msra.mxu0 %v253
        %533 = vmatpush.msra.mxu0 %v252
        %534 = vmatpush.msra.mxu0 %v251
        %535 = vmatpush.msra.mxu0 %v250
        %536 = vmatpush.msra.mxu0 %v249
        %537 = vmatpush.msra.mxu0 %v248
        %538 = vmatpush.msra.mxu0 %v247
        %539 = vmatpush.msra.mxu0 %v246
        %540 = vmatpush.msra.mxu0 %v245
        %541 = vmatpush.msra.mxu0 %v244
        %542 = vmatpush.msra.mxu0 %v243
        %543 = vmatmul.f32.gmra.mxu0 1.0
        %v544 = vpop.f32.mrf.mxu0
        %v545 = vadd.f32 %v525, %v544
        %546 = vdwg.mxu0
        %547 = vmatpush.msra.mxu0 %v274
        %548 = vmatpush.msra.mxu0 %v273
        %549 = vmatpush.msra.mxu0 %v272
        %550 = vmatpush.msra.mxu0 %v271
        %551 = vmatpush.msra.mxu0 %v270
        %552 = vmatpush.msra.mxu0 %v269
        %553 = vmatpush.msra.mxu0 %v268
        %554 = vmatpush.msra.mxu0 %v267
        %555 = vmatpush.msra.mxu0 %v266
        %556 = vmatpush.msra.mxu0 %v265
        %557 = vmatpush.msra.mxu0 %v264
        %558 = vmatpush.msra.mxu0 %v263
        %559 = vmatpush.msra.mxu0 %v262
        %560 = vmatpush.msra.mxu0 %v261
        %561 = vmatpush.msra.mxu0 %v260
        %562 = vmatpush.msra.mxu0 %v259
        %563 = vmatmul.f32.gmra.mxu0 1.0
        %v564 = vpop.f32.mrf.mxu0
        %v565 = vadd.f32 %v545, %v564
        %566 = vdwg.mxu0
        %567 = vmatpush.msra.mxu0 %v290
        %568 = vmatpush.msra.mxu0 %v289
        %569 = vmatpush.msra.mxu0 %v288
        %570 = vmatpush.msra.mxu0 %v287
        %571 = vmatpush.msra.mxu0 %v286
        %572 = vmatpush.msra.mxu0 %v285
        %573 = vmatpush.msra.mxu0 %v284
        %574 = vmatpush.msra.mxu0 %v283
        %575 = vmatpush.msra.mxu0 %v282
        %576 = vmatpush.msra.mxu0 %v281
        %577 = vmatpush.msra.mxu0 %v280
        %578 = vmatpush.msra.mxu0 %v279
        %579 = vmatpush.msra.mxu0 %v278
        %580 = vmatpush.msra.mxu0 %v277
        %581 = vmatpush.msra.mxu0 %v276
        %582 = vmatpush.msra.mxu0 %v275
        %583 = vmatmul.f32.gmra.mxu0 1.0
        %v584 = vpop.f32.mrf.mxu0
        %v585 = vadd.f32 %v565, %v584
        %586 = vdwg.mxu0
        %587 = vmatpush.msra.mxu0 %v306
        %588 = vmatpush.msra.mxu0 %v305
        %589 = vmatpush.msra.mxu0 %v304
        %590 = vmatpush.msra.mxu0 %v303
        %591 = vmatpush.msra.mxu0 %v302
        %592 = vmatpush.msra.mxu0 %v301
        %593 = vmatpush.msra.mxu0 %v300
        %594 = vmatpush.msra.mxu0 %v299
        %595 = vmatpush.msra.mxu0 %v298
        %596 = vmatpush.msra.mxu0 %v297
        %597 = vmatpush.msra.mxu0 %v296
        %598 = vmatpush.msra.mxu0 %v295
        %599 = vmatpush.msra.mxu0 %v294
        %600 = vmatpush.msra.mxu0 %v293
        %601 = vmatpush.msra.mxu0 %v292
        %602 = vmatpush.msra.mxu0 %v291
        %603 = vmatmul.f32.gmra.mxu0 1.0
        %v604 = vpop.f32.mrf.mxu0
        %v605 = vadd.f32 %v585, %v604
        %606 = vdwg.mxu0
        %607 = vmatpush.msra.mxu0 %v322
        %608 = vmatpush.msra.mxu0 %v321
        %609 = vmatpush.msra.mxu0 %v320
        %610 = vmatpush.msra.mxu0 %v319
        %611 = vmatpush.msra.mxu0 %v318
        %612 = vmatpush.msra.mxu0 %v317
        %613 = vmatpush.msra.mxu0 %v316
        %614 = vmatpush.msra.mxu0 %v315
        %615 = vmatpush.msra.mxu0 %v314
        %616 = vmatpush.msra.mxu0 %v313
        %617 = vmatpush.msra.mxu0 %v312
        %618 = vmatpush.msra.mxu0 %v311
        %619 = vmatpush.msra.mxu0 %v310
        %620 = vmatpush.msra.mxu0 %v309
        %621 = vmatpush.msra.mxu0 %v308
        %622 = vmatpush.msra.mxu0 %v307
        %623 = vmatmul.f32.gmra.mxu0 1.0
        %v624 = vpop.f32.mrf.mxu0
        %v625 = vadd.f32 %v605, %v624
        %626 = vdwg.mxu0
        %627 = vmatpush.msra.mxu0 %v338
        %628 = vmatpush.msra.mxu0 %v337
        %629 = vmatpush.msra.mxu0 %v336
        %630 = vmatpush.msra.mxu0 %v335
        %631 = vmatpush.msra.mxu0 %v334
        %632 = vmatpush.msra.mxu0 %v333
        %633 = vmatpush.msra.mxu0 %v332
        %634 = vmatpush.msra.mxu0 %v331
        %635 = vmatpush.msra.mxu0 %v330
        %636 = vmatpush.msra.mxu0 %v329
        %637 = vmatpush.msra.mxu0 %v328
        %638 = vmatpush.msra.mxu0 %v327
        %639 = vmatpush.msra.mxu0 %v326
        %640 = vmatpush.msra.mxu0 %v325
        %641 = vmatpush.msra.mxu0 %v324
        %642 = vmatpush.msra.mxu0 %v323
        %643 = vmatmul.f32.gmra.mxu0 1.0
        %v644 = vpop.f32.mrf.mxu0
        %v645 = vadd.f32 %v625, %v644
        %646 = vdwg.mxu0
        %647 = vmatpush.msra.mxu0 %v354
        %648 = vmatpush.msra.mxu0 %v353
        %649 = vmatpush.msra.mxu0 %v352
        %650 = vmatpush.msra.mxu0 %v351
        %651 = vmatpush.msra.mxu0 %v350
        %652 = vmatpush.msra.mxu0 %v349
        %653 = vmatpush.msra.mxu0 %v348
        %654 = vmatpush.msra.mxu0 %v347
        %655 = vmatpush.msra.mxu0 %v346
        %656 = vmatpush.msra.mxu0 %v345
        %657 = vmatpush.msra.mxu0 %v344
        %658 = vmatpush.msra.mxu0 %v343
        %659 = vmatpush.msra.mxu0 %v342
        %660 = vmatpush.msra.mxu0 %v341
        %661 = vmatpush.msra.mxu0 %v340
        %662 = vmatpush.msra.mxu0 %v339
        %663 = vmatmul.f32.gmra.mxu0 1.0
        %v664 = vpop.f32.mrf.mxu0
        %v665 = vadd.f32 %v645, %v664
        %666 = vdwg.mxu0
        %667 = vmatpush.msra.mxu0 %v370
        %668 = vmatpush.msra.mxu0 %v369
        %669 = vmatpush.msra.mxu0 %v368
        %670 = vmatpush.msra.mxu0 %v367
        %671 = vmatpush.msra.mxu0 %v366
        %672 = vmatpush.msra.mxu0 %v365
        %673 = vmatpush.msra.mxu0 %v364
        %674 = vmatpush.msra.mxu0 %v363
        %675 = vmatpush.msra.mxu0 %v362
        %676 = vmatpush.msra.mxu0 %v361
        %677 = vmatpush.msra.mxu0 %v360
        %678 = vmatpush.msra.mxu0 %v359
        %679 = vmatpush.msra.mxu0 %v358
        %680 = vmatpush.msra.mxu0 %v357
        %681 = vmatpush.msra.mxu0 %v356
        %682 = vmatpush.msra.mxu0 %v355
        %683 = vmatmul.f32.gmra.mxu0 1.0
        %v684 = vpop.f32.mrf.mxu0
        %v685 = vadd.f32 %v665, %v684
        %686 = vdwg.mxu0
        %687 = vmatpush.msra.mxu0 %v386
        %688 = vmatpush.msra.mxu0 %v385
        %689 = vmatpush.msra.mxu0 %v384
        %690 = vmatpush.msra.mxu0 %v383
        %691 = vmatpush.msra.mxu0 %v382
        %692 = vmatpush.msra.mxu0 %v381
        %693 = vmatpush.msra.mxu0 %v380
        %694 = vmatpush.msra.mxu0 %v379
        %695 = vmatpush.msra.mxu0 %v378
        %696 = vmatpush.msra.mxu0 %v377
        %697 = vmatpush.msra.mxu0 %v376
        %698 = vmatpush.msra.mxu0 %v375
        %699 = vmatpush.msra.mxu0 %v374
        %700 = vmatpush.msra.mxu0 %v373
        %701 = vmatpush.msra.mxu0 %v372
        %702 = vmatpush.msra.mxu0 %v371
        %703 = vmatmul.f32.gmra.mxu0 1.0
        %v704 = vpop.f32.mrf.mxu0
        %v705 = vadd.f32 %v685, %v704
        %706 = vdwg.mxu0
        %v707 = vmul.f32 %v131, %v131
        %v708 = vmul.f32 %v132, %v132
        %v709 = vmul.f32 %v133, %v133
        %v710 = vmul.f32 %v134, %v134
        %v711 = vmul.f32 %v135, %v135
        %v712 = vmul.f32 %v136, %v136
        %v713 = vmul.f32 %v137, %v137
        %v714 = vmul.f32 %v138, %v138
        %v715 = vmul.f32 %v139, %v139
        %v716 = vmul.f32 %v140, %v140
        %v717 = vmul.f32 %v141, %v141
        %v718 = vmul.f32 %v142, %v142
        %v719 = vmul.f32 %v143, %v143
        %v720 = vmul.f32 %v144, %v144
        %v721 = vmul.f32 %v145, %v145
        %v722 = vmul.f32 %v146, %v146
        %v723 = vmul.f32 %v147, %v147
        %v724 = vmul.f32 %v148, %v148
        %v725 = vmul.f32 %v149, %v149
        %v726 = vmul.f32 %v150, %v150
        %v727 = vmul.f32 %v151, %v151
        %v728 = vmul.f32 %v152, %v152
        %v729 = vmul.f32 %v153, %v153
        %v730 = vmul.f32 %v154, %v154
        %v731 = vmul.f32 %v155, %v155
        %v732 = vmul.f32 %v156, %v156
        %v733 = vmul.f32 %v157, %v157
        %v734 = vmul.f32 %v158, %v158
        %v735 = vmul.f32 %v159, %v159
        %v736 = vmul.f32 %v160, %v160
        %v737 = vmul.f32 %v161, %v161
        %v738 = vmul.f32 %v162, %v162
        %v739 = vmul.f32 %v163, %v163
        %v740 = vmul.f32 %v164, %v164
        %v741 = vmul.f32 %v165, %v165
        %v742 = vmul.f32 %v166, %v166
        %v743 = vmul.f32 %v167, %v167
        %v744 = vmul.f32 %v168, %v168
        %v745 = vmul.f32 %v169, %v169
        %v746 = vmul.f32 %v170, %v170
        %v747 = vmul.f32 %v171, %v171
        %v748 = vmul.f32 %v172, %v172
        %v749 = vmul.f32 %v173, %v173
        %v750 = vmul.f32 %v174, %v174
        %v751 = vmul.f32 %v175, %v175
        %v752 = vmul.f32 %v176, %v176
        %v753 = vmul.f32 %v177, %v177
        %v754 = vmul.f32 %v178, %v178
        %v755 = vmul.f32 %v179, %v179
        %v756 = vmul.f32 %v180, %v180
        %v757 = vmul.f32 %v181, %v181
        %v758 = vmul.f32 %v182, %v182
        %v759 = vmul.f32 %v183, %v183
        %v760 = vmul.f32 %v184, %v184
        %v761 = vmul.f32 %v185, %v185
        %v762 = vmul.f32 %v186, %v186
        %v763 = vmul.f32 %v187, %v187
        %v764 = vmul.f32 %v188, %v188
        %v765 = vmul.f32 %v189, %v189
        %v766 = vmul.f32 %v190, %v190
        %v767 = vmul.f32 %v191, %v191
        %v768 = vmul.f32 %v192, %v192
        %v769 = vmul.f32 %v193, %v193
        %v770 = vmul.f32 %v194, %v194
        %v771 = vmul.f32 %v195, %v195
        %v772 = vmul.f32 %v196, %v196
        %v773 = vmul.f32 %v197, %v197
        %v774 = vmul.f32 %v198, %v198
        %v775 = vmul.f32 %v199, %v199
        %v776 = vmul.f32 %v200, %v200
        %v777 = vmul.f32 %v201, %v201
        %v778 = vmul.f32 %v202, %v202
        %v779 = vmul.f32 %v203, %v203
        %v780 = vmul.f32 %v204, %v204
        %v781 = vmul.f32 %v205, %v205
        %v782 = vmul.f32 %v206, %v206
        %v783 = vmul.f32 %v207, %v207
        %v784 = vmul.f32 %v208, %v208
        %v785 = vmul.f32 %v209, %v209
        %v786 = vmul.f32 %v210, %v210
        %v787 = vmul.f32 %v211, %v211
        %v788 = vmul.f32 %v212, %v212
        %v789 = vmul.f32 %v213, %v213
        %v790 = vmul.f32 %v214, %v214
        %v791 = vmul.f32 %v215, %v215
        %v792 = vmul.f32 %v216, %v216
        %v793 = vmul.f32 %v217, %v217
        %v794 = vmul.f32 %v218, %v218
        %v795 = vmul.f32 %v219, %v219
        %v796 = vmul.f32 %v220, %v220
        %v797 = vmul.f32 %v221, %v221
        %v798 = vmul.f32 %v222, %v222
        %v799 = vmul.f32 %v223, %v223
        %v800 = vmul.f32 %v224, %v224
        %v801 = vmul.f32 %v225, %v225
        %v802 = vmul.f32 %v226, %v226
        %v803 = vmul.f32 %v227, %v227
        %v804 = vmul.f32 %v228, %v228
        %v805 = vmul.f32 %v229, %v229
        %v806 = vmul.f32 %v230, %v230
        %v807 = vmul.f32 %v231, %v231
        %v808 = vmul.f32 %v232, %v232
        %v809 = vmul.f32 %v233, %v233
        %v810 = vmul.f32 %v234, %v234
        %v811 = vmul.f32 %v235, %v235
        %v812 = vmul.f32 %v236, %v236
        %v813 = vmul.f32 %v237, %v237
        %v814 = vmul.f32 %v238, %v238
        %v815 = vmul.f32 %v239, %v239
        %v816 = vmul.f32 %v240, %v240
        %v817 = vmul.f32 %v241, %v241
        %v818 = vmul.f32 %v242, %v242
        %v819 = vmul.f32 %v243, %v243
        %v820 = vmul.f32 %v244, %v244
        %v821 = vmul.f32 %v245, %v245
        %v822 = vmul.f32 %v246, %v246
        %v823 = vmul.f32 %v247, %v247
        %v824 = vmul.f32 %v248, %v248
        %v825 = vmul.f32 %v249, %v249
        %v826 = vmul.f32 %v250, %v250
        %v827 = vmul.f32 %v251, %v251
        %v828 = vmul.f32 %v252, %v252
        %v829 = vmul.f32 %v253, %v253
        %v830 = vmul.f32 %v254, %v254
        %v831 = vmul.f32 %v255, %v255
        %v832 = vmul.f32 %v256, %v256
        %v833 = vmul.f32 %v257, %v257
        %v834 = vmul.f32 %v258, %v258
        %v835 = vmul.f32 %v259, %v259
        %v836 = vmul.f32 %v260, %v260
        %v837 = vmul.f32 %v261, %v261
        %v838 = vmul.f32 %v262, %v262
        %v839 = vmul.f32 %v263, %v263
        %v840 = vmul.f32 %v264, %v264
        %v841 = vmul.f32 %v265, %v265
        %v842 = vmul.f32 %v266, %v266
        %v843 = vmul.f32 %v267, %v267
        %v844 = vmul.f32 %v268, %v268
        %v845 = vmul.f32 %v269, %v269
        %v846 = vmul.f32 %v270, %v270
        %v847 = vmul.f32 %v271, %v271
        %v848 = vmul.f32 %v272, %v272
        %v849 = vmul.f32 %v273, %v273
        %v850 = vmul.f32 %v274, %v274
        %v851 = vmul.f32 %v275, %v275
        %v852 = vmul.f32 %v276, %v276
        %v853 = vmul.f32 %v277, %v277
        %v854 = vmul.f32 %v278, %v278
        %v855 = vmul.f32 %v279, %v279
        %v856 = vmul.f32 %v280, %v280
        %v857 = vmul.f32 %v281, %v281
        %v858 = vmul.f32 %v282, %v282
        %v859 = vmul.f32 %v283, %v283
        %v860 = vmul.f32 %v284, %v284
        %v861 = vmul.f32 %v285, %v285
        %v862 = vmul.f32 %v286, %v286
        %v863 = vmul.f32 %v287, %v287
        %v864 = vmul.f32 %v288, %v288
        %v865 = vmul.f32 %v289, %v289
        %v866 = vmul.f32 %v290, %v290
        %v867 = vmul.f32 %v291, %v291
        %v868 = vmul.f32 %v292, %v292
        %v869 = vmul.f32 %v293, %v293
        %v870 = vmul.f32 %v294, %v294
        %v871 = vmul.f32 %v295, %v295
        %v872 = vmul.f32 %v296, %v296
        %v873 = vmul.f32 %v297, %v297
        %v874 = vmul.f32 %v298, %v298
        %v875 = vmul.f32 %v299, %v299
        %v876 = vmul.f32 %v300, %v300
        %v877 = vmul.f32 %v301, %v301
        %v878 = vmul.f32 %v302, %v302
        %v879 = vmul.f32 %v303, %v303
        %v880 = vmul.f32 %v304, %v304
        %v881 = vmul.f32 %v305, %v305
        %v882 = vmul.f32 %v306, %v306
        %v883 = vmul.f32 %v307, %v307
        %v884 = vmul.f32 %v308, %v308
        %v885 = vmul.f32 %v309, %v309
        %v886 = vmul.f32 %v310, %v310
        %v887 = vmul.f32 %v311, %v311
        %v888 = vmul.f32 %v312, %v312
        %v889 = vmul.f32 %v313, %v313
        %v890 = vmul.f32 %v314, %v314
        %v891 = vmul.f32 %v315, %v315
        %v892 = vmul.f32 %v316, %v316
        %v893 = vmul.f32 %v317, %v317
        %v894 = vmul.f32 %v318, %v318
        %v895 = vmul.f32 %v319, %v319
        %v896 = vmul.f32 %v320, %v320
        %v897 = vmul.f32 %v321, %v321
        %v898 = vmul.f32 %v322, %v322
        %v899 = vmul.f32 %v323, %v323
        %v900 = vmul.f32 %v324, %v324
        %v901 = vmul.f32 %v325, %v325
        %v902 = vmul.f32 %v326, %v326
        %v903 = vmul.f32 %v327, %v327
        %v904 = vmul.f32 %v328, %v328
        %v905 = vmul.f32 %v329, %v329
        %v906 = vmul.f32 %v330, %v330
        %v907 = vmul.f32 %v331, %v331
        %v908 = vmul.f32 %v332, %v332
        %v909 = vmul.f32 %v333, %v333
        %v910 = vmul.f32 %v334, %v334
        %v911 = vmul.f32 %v335, %v335
        %v912 = vmul.f32 %v336, %v336
        %v913 = vmul.f32 %v337, %v337
        %v914 = vmul.f32 %v338, %v338
        %v915 = vmul.f32 %v339, %v339
        %v916 = vmul.f32 %v340, %v340
        %v917 = vmul.f32 %v341, %v341
        %v918 = vmul.f32 %v342, %v342
        %v919 = vmul.f32 %v343, %v343
        %v920 = vmul.f32 %v344, %v344
        %v921 = vmul.f32 %v345, %v345
        %v922 = vmul.f32 %v346, %v346
        %v923 = vmul.f32 %v347, %v347
        %v924 = vmul.f32 %v348, %v348
        %v925 = vmul.f32 %v349, %v349
        %v926 = vmul.f32 %v350, %v350
        %v927 = vmul.f32 %v351, %v351
        %v928 = vmul.f32 %v352, %v352
        %v929 = vmul.f32 %v353, %v353
        %v930 = vmul.f32 %v354, %v354
        %v931 = vmul.f32 %v355, %v355
        %v932 = vmul.f32 %v356, %v356
        %v933 = vmul.f32 %v357, %v357
        %v934 = vmul.f32 %v358, %v358
        %v935 = vmul.f32 %v359, %v359
        %v936 = vmul.f32 %v360, %v360
        %v937 = vmul.f32 %v361, %v361
        %v938 = vmul.f32 %v362, %v362
        %v939 = vmul.f32 %v363, %v363
        %v940 = vmul.f32 %v364, %v364
        %v941 = vmul.f32 %v365, %v365
        %v942 = vmul.f32 %v366, %v366
        %v943 = vmul.f32 %v367, %v367
        %v944 = vmul.f32 %v368, %v368
        %v945 = vmul.f32 %v369, %v369
        %v946 = vmul.f32 %v370, %v370
        %v947 = vmul.f32 %v371, %v371
        %v948 = vmul.f32 %v372, %v372
        %v949 = vmul.f32 %v373, %v373
        %v950 = vmul.f32 %v374, %v374
        %v951 = vmul.f32 %v375, %v375
        %v952 = vmul.f32 %v376, %v376
        %v953 = vmul.f32 %v377, %v377
        %v954 = vmul.f32 %v378, %v378
        %v955 = vmul.f32 %v379, %v379
        %v956 = vmul.f32 %v380, %v380
        %v957 = vmul.f32 %v381, %v381
        %v958 = vmul.f32 %v382, %v382
        %v959 = vmul.f32 %v383, %v383
        %v960 = vmul.f32 %v384, %v384
        %v961 = vmul.f32 %v385, %v385
        %v962 = vmul.f32 %v386, %v386
        %963 = vmatpush.msra.mxu0 %v722
        %964 = vmatpush.msra.mxu0 %v721
        %965 = vmatpush.msra.mxu0 %v720
        %966 = vmatpush.msra.mxu0 %v719
        %967 = vmatpush.msra.mxu0 %v718
        %968 = vmatpush.msra.mxu0 %v717
        %969 = vmatpush.msra.mxu0 %v716
        %970 = vmatpush.msra.mxu0 %v715
        %971 = vmatpush.msra.mxu0 %v714
        %972 = vmatpush.msra.mxu0 %v713
        %973 = vmatpush.msra.mxu0 %v712
        %974 = vmatpush.msra.mxu0 %v711
        %975 = vmatpush.msra.mxu0 %v710
        %976 = vmatpush.msra.mxu0 %v709
        %977 = vmatpush.msra.mxu0 %v708
        %978 = vmatpush.msra.mxu0 %v707
        %979 = vmatmul.f32.gmra.mxu0 1.0
        %v980 = vpop.f32.mrf.mxu0
        %v981 = vadd.f32 0.0, %v980
        %982 = vdwg.mxu0
        %983 = vmatpush.msra.mxu0 %v738
        %984 = vmatpush.msra.mxu0 %v737
        %985 = vmatpush.msra.mxu0 %v736
        %986 = vmatpush.msra.mxu0 %v735
        %987 = vmatpush.msra.mxu0 %v734
        %988 = vmatpush.msra.mxu0 %v733
        %989 = vmatpush.msra.mxu0 %v732
        %990 = vmatpush.msra.mxu0 %v731
        %991 = vmatpush.msra.mxu0 %v730
        %992 = vmatpush.msra.mxu0 %v729
        %993 = vmatpush.msra.mxu0 %v728
        %994 = vmatpush.msra.mxu0 %v727
        %995 = vmatpush.msra.mxu0 %v726
        %996 = vmatpush.msra.mxu0 %v725
        %997 = vmatpush.msra.mxu0 %v724
        %998 = vmatpush.msra.mxu0 %v723
        %999 = vmatmul.f32.gmra.mxu0 1.0
        %v1000 = vpop.f32.mrf.mxu0
        %v1001 = vadd.f32 %v981, %v1000
        %1002 = vdwg.mxu0
        %1003 = vmatpush.msra.mxu0 %v754
        %1004 = vmatpush.msra.mxu0 %v753
        %1005 = vmatpush.msra.mxu0 %v752
        %1006 = vmatpush.msra.mxu0 %v751
        %1007 = vmatpush.msra.mxu0 %v750
        %1008 = vmatpush.msra.mxu0 %v749
        %1009 = vmatpush.msra.mxu0 %v748
        %1010 = vmatpush.msra.mxu0 %v747
        %1011 = vmatpush.msra.mxu0 %v746
        %1012 = vmatpush.msra.mxu0 %v745
        %1013 = vmatpush.msra.mxu0 %v744
        %1014 = vmatpush.msra.mxu0 %v743
        %1015 = vmatpush.msra.mxu0 %v742
        %1016 = vmatpush.msra.mxu0 %v741
        %1017 = vmatpush.msra.mxu0 %v740
        %1018 = vmatpush.msra.mxu0 %v739
        %1019 = vmatmul.f32.gmra.mxu0 1.0
        %v1020 = vpop.f32.mrf.mxu0
        %v1021 = vadd.f32 %v1001, %v1020
        %1022 = vdwg.mxu0
        %1023 = vmatpush.msra.mxu0 %v770
        %1024 = vmatpush.msra.mxu0 %v769
        %1025 = vmatpush.msra.mxu0 %v768
        %1026 = vmatpush.msra.mxu0 %v767
        %1027 = vmatpush.msra.mxu0 %v766
        %1028 = vmatpush.msra.mxu0 %v765
        %1029 = vmatpush.msra.mxu0 %v764
        %1030 = vmatpush.msra.mxu0 %v763
        %1031 = vmatpush.msra.mxu0 %v762
        %1032 = vmatpush.msra.mxu0 %v761
        %1033 = vmatpush.msra.mxu0 %v760
        %1034 = vmatpush.msra.mxu0 %v759
        %1035 = vmatpush.msra.mxu0 %v758
        %1036 = vmatpush.msra.mxu0 %v757
        %1037 = vmatpush.msra.mxu0 %v756
        %1038 = vmatpush.msra.mxu0 %v755
        %1039 = vmatmul.f32.gmra.mxu0 1.0
        %v1040 = vpop.f32.mrf.mxu0
        %v1041 = vadd.f32 %v1021, %v1040
        %1042 = vdwg.mxu0
        %1043 = vmatpush.msra.mxu0 %v786
        %1044 = vmatpush.msra.mxu0 %v785
        %1045 = vmatpush.msra.mxu0 %v784
        %1046 = vmatpush.msra.mxu0 %v783
        %1047 = vmatpush.msra.mxu0 %v782
        %1048 = vmatpush.msra.mxu0 %v781
        %1049 = vmatpush.msra.mxu0 %v780
        %1050 = vmatpush.msra.mxu0 %v779
        %1051 = vmatpush.msra.mxu0 %v778
        %1052 = vmatpush.msra.mxu0 %v777
        %1053 = vmatpush.msra.mxu0 %v776
        %1054 = vmatpush.msra.mxu0 %v775
        %1055 = vmatpush.msra.mxu0 %v774
        %1056 = vmatpush.msra.mxu0 %v773
        %1057 = vmatpush.msra.mxu0 %v772
        %1058 = vmatpush.msra.mxu0 %v771
        %1059 = vmatmul.f32.gmra.mxu0 1.0
        %v1060 = vpop.f32.mrf.mxu0
        %v1061 = vadd.f32 %v1041, %v1060
        %1062 = vdwg.mxu0
        %1063 = vmatpush.msra.mxu0 %v802
        %1064 = vmatpush.msra.mxu0 %v801
        %1065 = vmatpush.msra.mxu0 %v800
        %1066 = vmatpush.msra.mxu0 %v799
        %1067 = vmatpush.msra.mxu0 %v798
        %1068 = vmatpush.msra.mxu0 %v797
        %1069 = vmatpush.msra.mxu0 %v796
        %1070 = vmatpush.msra.mxu0 %v795
        %1071 = vmatpush.msra.mxu0 %v794
        %1072 = vmatpush.msra.mxu0 %v793
        %1073 = vmatpush.msra.mxu0 %v792
        %1074 = vmatpush.msra.mxu0 %v791
        %1075 = vmatpush.msra.mxu0 %v790
        %1076 = vmatpush.msra.mxu0 %v789
        %1077 = vmatpush.msra.mxu0 %v788
        %1078 = vmatpush.msra.mxu0 %v787
        %1079 = vmatmul.f32.gmra.mxu0 1.0
        %v1080 = vpop.f32.mrf.mxu0
        %v1081 = vadd.f32 %v1061, %v1080
        %1082 = vdwg.mxu0
        %1083 = vmatpush.msra.mxu0 %v818
        %1084 = vmatpush.msra.mxu0 %v817
        %1085 = vmatpush.msra.mxu0 %v816
        %1086 = vmatpush.msra.mxu0 %v815
        %1087 = vmatpush.msra.mxu0 %v814
        %1088 = vmatpush.msra.mxu0 %v813
        %1089 = vmatpush.msra.mxu0 %v812
        %1090 = vmatpush.msra.mxu0 %v811
        %1091 = vmatpush.msra.mxu0 %v810
        %1092 = vmatpush.msra.mxu0 %v809
        %1093 = vmatpush.msra.mxu0 %v808
        %1094 = vmatpush.msra.mxu0 %v807
        %1095 = vmatpush.msra.mxu0 %v806
        %1096 = vmatpush.msra.mxu0 %v805
        %1097 = vmatpush.msra.mxu0 %v804
        %1098 = vmatpush.msra.mxu0 %v803
        %1099 = vmatmul.f32.gmra.mxu0 1.0
        %v1100 = vpop.f32.mrf.mxu0
        %v1101 = vadd.f32 %v1081, %v1100
        %1102 = vdwg.mxu0
        %1103 = vmatpush.msra.mxu0 %v834
        %1104 = vmatpush.msra.mxu0 %v833
        %1105 = vmatpush.msra.mxu0 %v832
        %1106 = vmatpush.msra.mxu0 %v831
        %1107 = vmatpush.msra.mxu0 %v830
        %1108 = vmatpush.msra.mxu0 %v829
        %1109 = vmatpush.msra.mxu0 %v828
        %1110 = vmatpush.msra.mxu0 %v827
        %1111 = vmatpush.msra.mxu0 %v826
        %1112 = vmatpush.msra.mxu0 %v825
        %1113 = vmatpush.msra.mxu0 %v824
        %1114 = vmatpush.msra.mxu0 %v823
        %1115 = vmatpush.msra.mxu0 %v822
        %1116 = vmatpush.msra.mxu0 %v821
        %1117 = vmatpush.msra.mxu0 %v820
        %1118 = vmatpush.msra.mxu0 %v819
        %1119 = vmatmul.f32.gmra.mxu0 1.0
        %v1120 = vpop.f32.mrf.mxu0
        %v1121 = vadd.f32 %v1101, %v1120
        %1122 = vdwg.mxu0
        %1123 = vmatpush.msra.mxu0 %v850
        %1124 = vmatpush.msra.mxu0 %v849
        %1125 = vmatpush.msra.mxu0 %v848
        %1126 = vmatpush.msra.mxu0 %v847
        %1127 = vmatpush.msra.mxu0 %v846
        %1128 = vmatpush.msra.mxu0 %v845
        %1129 = vmatpush.msra.mxu0 %v844
        %1130 = vmatpush.msra.mxu0 %v843
        %1131 = vmatpush.msra.mxu0 %v842
        %1132 = vmatpush.msra.mxu0 %v841
        %1133 = vmatpush.msra.mxu0 %v840
        %1134 = vmatpush.msra.mxu0 %v839
        %1135 = vmatpush.msra.mxu0 %v838
        %1136 = vmatpush.msra.mxu0 %v837
        %1137 = vmatpush.msra.mxu0 %v836
        %1138 = vmatpush.msra.mxu0 %v835
        %1139 = vmatmul.f32.gmra.mxu0 1.0
        %v1140 = vpop.f32.mrf.mxu0
        %v1141 = vadd.f32 %v1121, %v1140
        %1142 = vdwg.mxu0
        %1143 = vmatpush.msra.mxu0 %v866
        %1144 = vmatpush.msra.mxu0 %v865
        %1145 = vmatpush.msra.mxu0 %v864
        %1146 = vmatpush.msra.mxu0 %v863
        %1147 = vmatpush.msra.mxu0 %v862
        %1148 = vmatpush.msra.mxu0 %v861
        %1149 = vmatpush.msra.mxu0 %v860
        %1150 = vmatpush.msra.mxu0 %v859
        %1151 = vmatpush.msra.mxu0 %v858
        %1152 = vmatpush.msra.mxu0 %v857
        %1153 = vmatpush.msra.mxu0 %v856
        %1154 = vmatpush.msra.mxu0 %v855
        %1155 = vmatpush.msra.mxu0 %v854
        %1156 = vmatpush.msra.mxu0 %v853
        %1157 = vmatpush.msra.mxu0 %v852
        %1158 = vmatpush.msra.mxu0 %v851
        %1159 = vmatmul.f32.gmra.mxu0 1.0
        %v1160 = vpop.f32.mrf.mxu0
        %v1161 = vadd.f32 %v1141, %v1160
        %1162 = vdwg.mxu0
        %1163 = vmatpush.msra.mxu0 %v882
        %1164 = vmatpush.msra.mxu0 %v881
        %1165 = vmatpush.msra.mxu0 %v880
        %1166 = vmatpush.msra.mxu0 %v879
        %1167 = vmatpush.msra.mxu0 %v878
        %1168 = vmatpush.msra.mxu0 %v877
        %1169 = vmatpush.msra.mxu0 %v876
        %1170 = vmatpush.msra.mxu0 %v875
        %1171 = vmatpush.msra.mxu0 %v874
        %1172 = vmatpush.msra.mxu0 %v873
        %1173 = vmatpush.msra.mxu0 %v872
        %1174 = vmatpush.msra.mxu0 %v871
        %1175 = vmatpush.msra.mxu0 %v870
        %1176 = vmatpush.msra.mxu0 %v869
        %1177 = vmatpush.msra.mxu0 %v868
        %1178 = vmatpush.msra.mxu0 %v867
        %1179 = vmatmul.f32.gmra.mxu0 1.0
        %v1180 = vpop.f32.mrf.mxu0
        %v1181 = vadd.f32 %v1161, %v1180
        %1182 = vdwg.mxu0
        %1183 = vmatpush.msra.mxu0 %v898
        %1184 = vmatpush.msra.mxu0 %v897
        %1185 = vmatpush.msra.mxu0 %v896
        %1186 = vmatpush.msra.mxu0 %v895
        %1187 = vmatpush.msra.mxu0 %v894
        %1188 = vmatpush.msra.mxu0 %v893
        %1189 = vmatpush.msra.mxu0 %v892
        %1190 = vmatpush.msra.mxu0 %v891
        %1191 = vmatpush.msra.mxu0 %v890
        %1192 = vmatpush.msra.mxu0 %v889
        %1193 = vmatpush.msra.mxu0 %v888
        %1194 = vmatpush.msra.mxu0 %v887
        %1195 = vmatpush.msra.mxu0 %v886
        %1196 = vmatpush.msra.mxu0 %v885
        %1197 = vmatpush.msra.mxu0 %v884
        %1198 = vmatpush.msra.mxu0 %v883
        %1199 = vmatmul.f32.gmra.mxu0 1.0
        %v1200 = vpop.f32.mrf.mxu0
        %v1201 = vadd.f32 %v1181, %v1200
        %1202 = vdwg.mxu0
        %1203 = vmatpush.msra.mxu0 %v914
        %1204 = vmatpush.msra.mxu0 %v913
        %1205 = vmatpush.msra.mxu0 %v912
        %1206 = vmatpush.msra.mxu0 %v911
        %1207 = vmatpush.msra.mxu0 %v910
        %1208 = vmatpush.msra.mxu0 %v909
        %1209 = vmatpush.msra.mxu0 %v908
        %1210 = vmatpush.msra.mxu0 %v907
        %1211 = vmatpush.msra.mxu0 %v906
        %1212 = vmatpush.msra.mxu0 %v905
        %1213 = vmatpush.msra.mxu0 %v904
        %1214 = vmatpush.msra.mxu0 %v903
        %1215 = vmatpush.msra.mxu0 %v902
        %1216 = vmatpush.msra.mxu0 %v901
        %1217 = vmatpush.msra.mxu0 %v900
        %1218 = vmatpush.msra.mxu0 %v899
        %1219 = vmatmul.f32.gmra.mxu0 1.0
        %v1220 = vpop.f32.mrf.mxu0
        %v1221 = vadd.f32 %v1201, %v1220
        %1222 = vdwg.mxu0
        %1223 = vmatpush.msra.mxu0 %v930
        %1224 = vmatpush.msra.mxu0 %v929
        %1225 = vmatpush.msra.mxu0 %v928
        %1226 = vmatpush.msra.mxu0 %v927
        %1227 = vmatpush.msra.mxu0 %v926
        %1228 = vmatpush.msra.mxu0 %v925
        %1229 = vmatpush.msra.mxu0 %v924
        %1230 = vmatpush.msra.mxu0 %v923
        %1231 = vmatpush.msra.mxu0 %v922
        %1232 = vmatpush.msra.mxu0 %v921
        %1233 = vmatpush.msra.mxu0 %v920
        %1234 = vmatpush.msra.mxu0 %v919
        %1235 = vmatpush.msra.mxu0 %v918
        %1236 = vmatpush.msra.mxu0 %v917
        %1237 = vmatpush.msra.mxu0 %v916
        %1238 = vmatpush.msra.mxu0 %v915
        %1239 = vmatmul.f32.gmra.mxu0 1.0
        %v1240 = vpop.f32.mrf.mxu0
        %v1241 = vadd.f32 %v1221, %v1240
        %1242 = vdwg.mxu0
        %1243 = vmatpush.msra.mxu0 %v946
        %1244 = vmatpush.msra.mxu0 %v945
        %1245 = vmatpush.msra.mxu0 %v944
        %1246 = vmatpush.msra.mxu0 %v943
        %1247 = vmatpush.msra.mxu0 %v942
        %1248 = vmatpush.msra.mxu0 %v941
        %1249 = vmatpush.msra.mxu0 %v940
        %1250 = vmatpush.msra.mxu0 %v939
        %1251 = vmatpush.msra.mxu0 %v938
        %1252 = vmatpush.msra.mxu0 %v937
        %1253 = vmatpush.msra.mxu0 %v936
        %1254 = vmatpush.msra.mxu0 %v935
        %1255 = vmatpush.msra.mxu0 %v934
        %1256 = vmatpush.msra.mxu0 %v933
        %1257 = vmatpush.msra.mxu0 %v932
        %1258 = vmatpush.msra.mxu0 %v931
        %1259 = vmatmul.f32.gmra.mxu0 1.0
        %v1260 = vpop.f32.mrf.mxu0
        %v1261 = vadd.f32 %v1241, %v1260
        %1262 = vdwg.mxu0
        %1263 = vmatpush.msra.mxu0 %v962
        %1264 = vmatpush.msra.mxu0 %v961
        %1265 = vmatpush.msra.mxu0 %v960
        %1266 = vmatpush.msra.mxu0 %v959
        %1267 = vmatpush.msra.mxu0 %v958
        %1268 = vmatpush.msra.mxu0 %v957
        %1269 = vmatpush.msra.mxu0 %v956
        %1270 = vmatpush.msra.mxu0 %v955
        %1271 = vmatpush.msra.mxu0 %v954
        %1272 = vmatpush.msra.mxu0 %v953
        %1273 = vmatpush.msra.mxu0 %v952
        %1274 = vmatpush.msra.mxu0 %v951
        %1275 = vmatpush.msra.mxu0 %v950
        %1276 = vmatpush.msra.mxu0 %v949
        %1277 = vmatpush.msra.mxu0 %v948
        %1278 = vmatpush.msra.mxu0 %v947
        %1279 = vmatmul.f32.gmra.mxu0 1.0
        %v1280 = vpop.f32.mrf.mxu0
        %v1281 = vadd.f32 %v1261, %v1280
        %1282 = vdwg.mxu0
        %v1283 = vld [vmem:[#allocation5] sm:$0x3]
        %v1285 = vrot.slane %v1281, 7
        %vm1287 = vcmask 1040384
        %v1288 = vsel %vm1287, %v705, %v1285
        %v1289 = vadd.f32 %v1283, %v1288
        %1290 = vst [vmem:[#allocation5] sm:$0x3] %v1289
        // Predicated region
        $region33: #{tpu_custom_call.1} parent=23 // pred_check
          %p1291 = pneg %p55
        $region34: #{tpu_custom_call.1} parent=23 // pred_check_branch
          %1293 = sbr.rel (%p1291) target = $region36
        $region35: #{tpu_custom_call.1} parent=23 // pred_region
          %1295 = vsyncadd [#allocation4], 0
          %s1297 = sshll.u32 [#allocation5], 4
          %s1298 = int_to_ptr.vmem [resolvable:$true] %s1297
          %s1299 = sshll.u32 %s1, 4
          %s1300 = int_to_ptr.hbm [resolvable:$true] %s1299
          %1302 = dma.vmem_to_hbm [thread:$0]  %s1298, 32, %s1300, [#allocation4]
        $region36: #{tpu_custom_call.1} parent=23 // pred_fallthru
          _
        // Predicated region
        $region37: #{tpu_custom_call.1} parent=23 // pred_check
          %p1303 = pneg %p55
        $region38: #{tpu_custom_call.1} parent=23 // pred_check_branch
          %1305 = sbr.rel (%p1303) target = $region40
        $region39: #{tpu_custom_call.1} parent=23 // pred_region
          %1307 = dma.done [#allocation4], 32
        $region40: #{tpu_custom_call.1} parent=23 // pred_fallthru
          _
      $region24: #{tpu_custom_call.1} parent=5 // pred_fallthru
        _
      %p1308 = scmp.le.s32.totalorder 2, %s11
      // Predicated region
      $region41: #{tpu_custom_call.1} parent=5 // pred_check
        %p1309 = pneg %p1308
      $region42: #{tpu_custom_call.1} parent=5 // pred_check_branch
        %1311 = sbr.rel (%p1309) target = $region44
      $region43: #{tpu_custom_call.1} parent=5 // pred_region
        %s1312 = ssub.s32 %s11, 2
      $region44: #{tpu_custom_call.1} parent=5 // pred_fallthru
        _
    $region6: #{tpu_custom_call.1} parent=1 // loop_footer
      %s15 = sadd.s32 1, %s11
    $region7: #{tpu_custom_call.1} parent=1 // loop_footer_branch
      %10 = sbr.rel target = $region3
    $region8: #{tpu_custom_call.1} parent=1 // loop_exit
      _
    %1313 = vsyncpa [#allocation3], 1
    %s1314 = scalar_lea.sflag [#allocation3], 1
    %1315 = vsyncpa %s1314, 1
    %1316 = vsyncpa [#allocation4], 1
    %s1317 = scalar_lea.sflag [#allocation4], 1
    %1318 = vsyncpa %s1317, 1

</llo_original>
